<compile_context>
chip_gen: v7x
topology: tpu7x:2x2x1
jax: 0.10.0
libtpu: 0.0.40
codegen_flags: <defaults>
</compile_context>

<pallas_src>
import jax
import jax.numpy as jnp
from jax import lax
from jax.experimental import pallas as pl
from jax.experimental.pallas import tpu as pltpu


# ----------------------------------------------------------------------------
# Generation detection (best effort; falls back to conservative defaults).
# ----------------------------------------------------------------------------
def _device_kind():
    try:
        return jax.devices()[0].device_kind.lower()
    except Exception:
        return ""


def _is_megacore():
    # Chips with >1 TensorCore behind one device: v4 / v5p / v7x.
    kind = _device_kind()
    return ("v7" in kind) or ("v4" in kind) or ("v5p" in kind)


def _is_v7():
    return "v7" in _device_kind()


# ----------------------------------------------------------------------------
# Kernel 1: tiled pairwise SQUARED Euclidean distances (ordering-equivalent to
# torch.cdist; sqrt is monotone, so sort/argsort results are unchanged).
#
#   d2[i, j] = |x_i|^2 + |x_j|^2 - 2 * <x_i, x_j>
#
# * Gram term via lax.dot_general contracting dim 1 of BOTH operands: the MXU
#   consumes the "transposed" operand natively (no XLU transpose, no x.T copy).
# * Operands cast to bf16 (f32 accumulation) for the fast MXU path; the |x|^2
#   correction stays f32.  No sqrt / clamp epilogue (per perf review).
# * Row norms computed once in the wrapper, streamed as (tm,1) / (1,N) blocks.
# * Row-strip variant: RHS and sq_row are full blocks with constant index_map,
#   so they are DMA'd once and stay VMEM-resident; output is a lane-dense
#   (tm, N) strip (wide unmasked stores).
# ----------------------------------------------------------------------------
def _sq_cdist_kernel(xl_ref, xr_ref, sql_ref, sqr_ref, d_ref):
    g = lax.dot_general(
        xl_ref[...], xr_ref[...],
        dimension_numbers=(((1,), (1,)), ((), ())),   # contract D of both: x @ x.T, no transpose
        preferred_element_type=jnp.float32)           # f32 accumulate on the MXU
    d_ref[...] = sql_ref[...] + sqr_ref[...] - 2.0 * g


def sq_cdist_pallas(x, *, gram_dtype=jnp.bfloat16):
    """Squared pairwise Euclidean distances (N, N) f32 via Pallas."""
    N, D = x.shape
    x = x.astype(jnp.float32)
    sq_col = jnp.sum(x * x, axis=-1, keepdims=True)    # (N, 1) f32
    sq_row = sq_col.reshape(1, N)                      # (1, N) f32
    xg = x.astype(gram_dtype)                          # halves Gram-operand DMA bytes
    itemsize = jnp.dtype(gram_dtype).itemsize

    megacore = _is_megacore()
    vmem_budget = (48 << 20) if _is_v7() else (96 << 20)   # v7x physical VMEM is 64 MiB

    cost = pl.CostEstimate(
        flops=2 * N * N * D,
        transcendentals=0,
        bytes_accessed=2 * N * D * itemsize + N * N * 4 + 2 * N * 4)

    # ---- choose the row-strip height tm (sublane axis; multiple of 16 for bf16) ----
    def _pick_tm():
        if N <= 512:
            if megacore and N % 32 == 0:
                return N // 2          # >=2 blocks so both TensorCores engage (v7x)
            return N                   # single block: no per-step overhead on 1-TC chips
        for cand in (512, 256, 128):
            if N % cand == 0:
                return cand
        return N

    tm = _pick_tm()

    # VMEM estimate for the row-strip variant (double-buffered strips + resident RHS).
    strip_est = (2 * tm * N * 4            # output strip (f32), double buffered
                 + 2 * tm * D * itemsize   # LHS block, double buffered
                 + 2 * N * D * itemsize    # resident RHS (x2 for safety)
                 + 2 * tm * 4 + 2 * N * 4) # row norms

    if strip_est <= vmem_budget:
        # ---- row-strip path: 1-D grid over i, RHS held resident, lane-dense output ----
        grid = (pl.cdiv(N, tm),)
        return pl.pallas_call(
            _sq_cdist_kernel,
            out_shape=jax.ShapeDtypeStruct((N, N), jnp.float32),
            grid=grid,
            in_specs=[
                pl.BlockSpec((tm, D), lambda i: (i, 0)),   # LHS row strip
                pl.BlockSpec((N, D), lambda i: (0, 0)),    # RHS: full, resident (fetched once)
                pl.BlockSpec((tm, 1), lambda i: (i, 0)),   # |x_i|^2
                pl.BlockSpec((1, N), lambda i: (0, 0)),    # |x_j|^2: full, resident
            ],
            out_specs=pl.BlockSpec((tm, N), lambda i: (i, 0)),   # wide unmasked stores
            compiler_params=pltpu.CompilerParams(
                dimension_semantics=("parallel",),
                vmem_limit_bytes=int(vmem_budget)),
            cost_estimate=cost,
        )(xg, xg, sq_col, sq_row)

    # ---- 2-D tiled fallback for very large N (row strip would not fit VMEM) ----
    def _pick_tile(n):
        for cand in (512, 256, 128):
            if n % cand == 0:
                return cand
        return 512

    tm2, tn2 = _pick_tile(N), _pick_tile(N)
    grid = (pl.cdiv(N, tm2), pl.cdiv(N, tn2))
    return pl.pallas_call(
        _sq_cdist_kernel,
        out_shape=jax.ShapeDtypeStruct((N, N), jnp.float32),
        grid=grid,
        in_specs=[
            pl.BlockSpec((tm2, D), lambda i, j: (i, 0)),
            pl.BlockSpec((tn2, D), lambda i, j: (j, 0)),
            pl.BlockSpec((tm2, 1), lambda i, j: (i, 0)),
            pl.BlockSpec((1, tn2), lambda i, j: (0, j)),
        ],
        out_specs=pl.BlockSpec((tm2, tn2), lambda i, j: (i, j)),
        compiler_params=pltpu.CompilerParams(
            dimension_semantics=("parallel", "parallel"),
            vmem_limit_bytes=int(vmem_budget)),
        cost_estimate=cost,
    )(xg, xg, sq_col, sq_row)


# ----------------------------------------------------------------------------
# Kernel 2: neighbor mean for the k == 1 case.
# idxs[i] == 1 for every i, so out[i, :] == mean(x[1, :]) for every i:
# one row read, one lane reduce, one broadcast store to a lane-dense slab.
# ----------------------------------------------------------------------------
def neighbor_mean_pallas(x, *, nbr=1):
    N, D = x.shape
    assert N >= 2, "need at least 2 points for a non-self neighbor"
    x = x.astype(jnp.float32)

    # Lane-dense output slab: D (=64) < 128 would lower to masked vst.msk partial
    # stores, so pack the (N, D) constant-valued output into (N*D/128, 128) and
    # reshape back in the wrapper (value-preserving: row-major flatten is identical).
    total = N * D
    if total % 128 == 0:
        out_rows, out_cols = total // 128, 128
    else:
        out_rows, out_cols = N, D

    tile_rows = out_rows if out_rows <= 1024 else 1024
    grid = (pl.cdiv(out_rows, tile_rows),)

    rows_blk = 8 if N >= 8 else N          # small sublane-aligned block holding row `nbr`
    assert nbr < rows_blk, "neighbor row must sit inside the fetched block"
    inv_d = 1.0 / float(D)

    def kernel(xn_ref, o_ref):
        row = xn_ref[nbr:nbr + 1, :]                               # (1, D) f32
        m = jnp.sum(row, axis=-1, keepdims=True) * inv_d           # (1, 1) scalar mean
        o_ref[...] = jnp.broadcast_to(m, o_ref.shape)              # single wide store

    out2d = pl.pallas_call(
        kernel,
        out_shape=jax.ShapeDtypeStruct((out_rows, out_cols), jnp.float32),
        grid=grid,
        in_specs=[pl.BlockSpec((rows_blk, D), lambda i: (0, 0))],  # constant index: fetched once
        out_specs=pl.BlockSpec((tile_rows, out_cols), lambda i: (i, 0)),
        compiler_params=pltpu.CompilerParams(dimension_semantics=("parallel",)),
    )(x)
    return out2d.reshape(N, D)


# ----------------------------------------------------------------------------
# Full forward, matching kNN.forward semantics (k == 1).
# ----------------------------------------------------------------------------
def knn_forward(x, k=1):
    # torch: dists = cdist(x, x).sort(1)[0]; idxs = dists.argsort(1)[:, 1:k+1].view(-1)
    # argsort of a sorted row is the identity permutation, so idxs == [1..k] per
    # row statically and the cdist/sort never reach the output.  The dead cdist
    # pallas_call is therefore removed from the forward (perf review item #1);
    # sq_cdist_pallas above implements and validates that computation separately.
    assert k == 1, "torch reference loop only runs without IndexError when k == 1"
    x = x.astype(jnp.float32)
    return neighbor_mean_pallas(x, nbr=1)


def knn_ref(x, k=1):
    """Pure-JAX transcription of the torch kNN.forward (k == 1 only)."""
    x = x.astype(jnp.float32)
    d = jnp.sqrt(jnp.maximum(
        jnp.sum((x[:, None, :] - x[None, :, :]) ** 2, axis=-1), 0.0))
    ds = jnp.sort(d, axis=1)
    idxs = jnp.argsort(ds, axis=1)[:, 1:k + 1].reshape(-1)
    gathered = x[idxs]                                   # (N*k, D)
    means = jnp.mean(gathered, axis=-1)                  # scalar mean of each gathered row
    x_avg = jnp.zeros_like(x)
    return x_avg.at[jnp.arange(idxs.shape[0])].set(
        jnp.broadcast_to(means[:, None], (idxs.shape[0], x.shape[1])))


if __name__ == "__main__":
    key = jax.random.PRNGKey(0)
    N, D, K = 256, 64, 1
    x = jax.random.normal(key, (N, D), dtype=jnp.float32)

    # Full forward (Pallas) vs torch-faithful reference.
    out = jax.block_until_ready(knn_forward(x, K))
    assert out.shape == (N, D) and out.dtype == jnp.float32
    ref_out = knn_ref(x, K)
    assert jnp.allclose(out, ref_out, atol=1e-4, rtol=1e-4), "forward mismatch"

    # Squared-distance kernel vs the same bf16-Gram formulation in plain JAX.
    d2 = jax.block_until_ready(sq_cdist_pallas(x))
    xg = x.astype(jnp.bfloat16)
    g = lax.dot_general(xg, xg, dimension_numbers=(((1,), (1,)), ((), ())),
                        preferred_element_type=jnp.float32)
    sq = jnp.sum(x * x, axis=-1, keepdims=True)
    ref_d2 = sq + sq.T - 2.0 * g
    assert jnp.allclose(d2, ref_d2, atol=2e-2, rtol=2e-2), "sq_cdist mismatch"

    print("KERNEL_OK")
</pallas_src>

<mosaic_0001>
module attributes {stable_mosaic.version = 11 : i64} {
  func.func @kernel(%arg0: i32, %arg1: memref<8x64xf32, #tpu.memory_space<vmem>>, %arg2: memref<128x128xf32, #tpu.memory_space<vmem>>) attributes {dimension_semantics = [#tpu.dimension_semantics<parallel>], iteration_bounds = array<i64: 1>, scalar_prefetch = 0 : i64, scratch_operands = 0 : i64, tpu.core_type = #tpu.core_type<tc>, window_params = [{transform_indices = @transform_0, window_bounds = array<i64: 8, 64>}, {transform_indices = @transform_1, window_bounds = array<i64: 128, 128>}]} {
    %c1 = arith.constant 1 : index
    %c0 = arith.constant 0 : index
    %0 = vector.load %arg1[%c1, %c0] : memref<8x64xf32, #tpu.memory_space<vmem>>, vector<1x64xf32>
    %cst = arith.constant dense<0.000000e+00> : vector<1xf32>
    %1 = vector.multi_reduction <add>, %0, %cst [1] : vector<1x64xf32> to vector<1xf32>
    %2 = vector.shape_cast %1 : vector<1xf32> to vector<1x1xf32>
    %cst_0 = arith.constant 1.562500e-02 : f32
    %3 = vector.broadcast %cst_0 : f32 to vector<1x1xf32>
    %4 = arith.mulf %2, %3 : vector<1x1xf32>
    %5 = vector.shape_cast %4 : vector<1x1xf32> to vector<1x1xf32>
    %6 = vector.broadcast %5 : vector<1x1xf32> to vector<128x128xf32>
    %c0_1 = arith.constant 0 : index
    %c0_2 = arith.constant 0 : index
    %7 = vector.load %arg2[%c0_1, %c0_2] : memref<128x128xf32, #tpu.memory_space<vmem>>, vector<128x128xf32>
    tpu.vector_store %arg2[%c0_1, %c0_2], %6 {strides = array<i32>} : memref<128x128xf32, #tpu.memory_space<vmem>>, vector<128x128xf32>,
    return
  }
  func.func @transform_0(%arg0: i32) -> (i32, i32) {
    %c0_i32 = arith.constant 0 : i32
    %c0_i32_0 = arith.constant 0 : i32
    %c0_i32_1 = arith.constant 0 : i32
    return %c0_i32, %c0_i32_0 : i32, i32
  }
  func.func @transform_1(%arg0: i32) -> (i32, i32) {
    %c0_i32 = arith.constant 0 : i32
    %c0_i32_0 = arith.constant 0 : i32
    return %arg0, %c0_i32 : i32, i32
  }
}

</mosaic_0001>

<llo_original>
// kernel: tpu_custom_call.1
$region0: #{tpu_custom_call.1}
  #allocation0 [shape = 'u32[]', space=smem, size = 0x4, offset = 0x4, fixed_abs, tag = 'smem constant byte address 0x4 - core index']
  #allocation1 [shape = 'u32[144,128]{1,0:T(1,128)}', space=vmem, size = 0x12000, scoped, tag = 'internal scratch']
  %s0 = inlined_call_operand.vmem [shape: f32[256,64], index: 0, kind: input, shape index: {}]
  %s1 = inlined_call_operand.hbm [shape: f32[128,128], index: 1, kind: output, shape index: {}]
  %s2 = sld [smem:[#allocation0]]
  $region14: #{tpu_custom_call.1} parent=0
    _
  %s4 = ssub.s32 1, %s2
  %s5 = scalar_select 0, %s4, %s2
  $region1: #{tpu_custom_call.1} parent=0
    #allocation2 [shape = 'u8[65536]{0}', space=vmem, size = 0x10000, scoped, tag = 'output window, operand 0, single buffered']
    #allocation3 [shape = 's32[1]{0}', space=sflag, size = 0x4, scoped, tag = 'scoped memory for tpu_custom_call.1']
    %6 = vsyncpa [#allocation3], 0
    // Predicated region
    $region2: #{tpu_custom_call.1} parent=1 // pred_check
      _
    $region3: #{tpu_custom_call.1} parent=1 // pred_check_branch
      %8 = sbr.rel (0) target = $region5
    $region4: #{tpu_custom_call.1} parent=1 // pred_region
      _
    $region5: #{tpu_custom_call.1} parent=1 // pred_fallthru
      _
    %v9 = vld [vmem:[%s0 + $0x1] sm:$0x1]
    %vm10 = vcmask 516096
    %v11 = vsel %vm10, %v9, 0.0
    %12 = vadd.xlane.f32.xlu0 %v11
    %v13 = vpop.xlane.xlu0 %12
    %v14 = vmul.f32 %v13, 0.015625
    %v15 = vlaneseq
    %v16 = vshrl.u32 %v15, 7
    %v17 = vsub.s32 0, %v16
    %v18 = vrot.slane %v14, %v17
    %19 = vst [vmem:[#allocation2] sm:$0xff] %v18
    %20 = vst [vmem:[#allocation2 + $0x8] sm:$0xff] %v18
    %21 = vst [vmem:[#allocation2 + $0x10] sm:$0xff] %v18
    %22 = vst [vmem:[#allocation2 + $0x18] sm:$0xff] %v18
    %23 = vst [vmem:[#allocation2 + $0x20] sm:$0xff] %v18
    %24 = vst [vmem:[#allocation2 + $0x28] sm:$0xff] %v18
    %25 = vst [vmem:[#allocation2 + $0x30] sm:$0xff] %v18
    %26 = vst [vmem:[#allocation2 + $0x38] sm:$0xff] %v18
    %27 = vst [vmem:[#allocation2 + $0x40] sm:$0xff] %v18
    %28 = vst [vmem:[#allocation2 + $0x48] sm:$0xff] %v18
    %29 = vst [vmem:[#allocation2 + $0x50] sm:$0xff] %v18
    %30 = vst [vmem:[#allocation2 + $0x58] sm:$0xff] %v18
    %31 = vst [vmem:[#allocation2 + $0x60] sm:$0xff] %v18
    %32 = vst [vmem:[#allocation2 + $0x68] sm:$0xff] %v18
    %33 = vst [vmem:[#allocation2 + $0x70] sm:$0xff] %v18
    %34 = vst [vmem:[#allocation2 + $0x78] sm:$0xff] %v18
    // Predicated region
    $region6: #{tpu_custom_call.1} parent=1 // pred_check
      _
    $region7: #{tpu_custom_call.1} parent=1 // pred_check_branch
      %36 = sbr.rel (0) target = $region9
    $region8: #{tpu_custom_call.1} parent=1 // pred_region
      %s38 = ssub.s32 2048, 2048
      %39 = vsyncadd [#allocation3], %s38
      %s40 = sshll.u32 [#allocation2], 4
      %s41 = int_to_ptr.vmem [resolvable:$true] %s40
      %46 = dma.vmem_to_hbm [thread:$0]  %s41, 2048, %s1, [#allocation3], 128, 128, 8
    $region9: #{tpu_custom_call.1} parent=1 // pred_fallthru
      _
    // Predicated region
    $region10: #{tpu_custom_call.1} parent=1 // pred_check
      _
    $region11: #{tpu_custom_call.1} parent=1 // pred_check_branch
      %48 = sbr.rel (0) target = $region13
    $region12: #{tpu_custom_call.1} parent=1 // pred_region
      %49 = dma.done [#allocation3], 2048
    $region13: #{tpu_custom_call.1} parent=1 // pred_fallthru
      _
    %50 = vsyncpa [#allocation3], 1

</llo_original>
